<compile_context>
chip_gen: v5e
topology: v5e:2x2
jax: 0.10.0
libtpu: 0.0.40
codegen_flags: <defaults>
</compile_context>

<pallas_src>
import jax
import jax.numpy as jnp
from jax import lax
from jax.experimental import pallas as pl
from jax.experimental.pallas import tpu as pltpu

H1 = 128
H2 = 64


def _round_up(n, m):
    return ((n + m - 1) // m) * m


def mlp_kernel(x_ref, w1_ref, b1_ref, w2_ref, b2_ref, w3c_ref, b3_ref, o_ref):
    # x_ref  : (tb, D)  row-major batch tile, f32 (straight from HBM, no transpose)
    # w1_ref : (H1, D)  bf16 (resident),  b1_ref : (H1, 1) f32
    # w2_ref : (H2, H1) bf16 (resident),  b2_ref : (H2, 1) f32
    # w3c_ref: (H2, 1)  f32,              b3_ref : (1, 1)  f32
    # o_ref  : (1, tb)  lane-dense output slab (batch on the lane axis)
    x_bf = x_ref[...].astype(jnp.bfloat16)

    # h1^T = W1 @ x^T : contract the feature axis of both operands so the batch
    # lands on the 128-wide lane axis; bf16 operands, f32 MXU accumulation.
    h1 = lax.dot_general(
        w1_ref[...], x_bf,
        dimension_numbers=(((1,), (1,)), ((), ())),
        preferred_element_type=jnp.float32,
    )
    h1 = jnp.maximum(h1 + b1_ref[...], 0.0)

    h2 = jnp.dot(w2_ref[...], h1.astype(jnp.bfloat16),
                 preferred_element_type=jnp.float32)
    h2 = jnp.maximum(h2 + b2_ref[...], 0.0)

    # Final (64 -> 1) layer: VPU multiply + sublane reduce instead of an N=1 MXU
    # pass; result is already lane-dense (1, tb).  Kept in f32 for accuracy.
    y = jnp.sum(h2 * w3c_ref[...], axis=0, keepdims=True) + b3_ref[...]
    o_ref[...] = y.astype(o_ref.dtype)


def mlp_forward(x, w1, b1, w2, b2, w3, b3, *, tb_max=2048):
    """Fused MLP forward.

    x: (B, D) float32.  Weights/biases in PyTorch nn.Linear layout:
      w1: (128, D), b1: (128,), w2: (64, 128), b2: (64,), w3: (1, 64), b3: (1,)
    Returns (B, 1) float32.
    """
    B, D = x.shape

    # Tile selection: multiple of 128 (lane-dense output), capped at tb_max to
    # keep per-step VMEM small, and split into >= 2 tiles whenever the batch
    # allows it so v7x's two TensorCores both get work.
    b128 = _round_up(B, 128)
    if b128 <= 128:
        tb = 128
    else:
        tb = max(128, min(tb_max, _round_up(b128 // 2, 128)))
    num_tiles = pl.cdiv(B, tb)

    # Wrapper-side weight prep only (tiny, ~50 KiB): bf16 MXU operands for the
    # two big matmuls; biases and the final column stay f32.
    w1b = w1.astype(jnp.bfloat16)
    w2b = w2.astype(jnp.bfloat16)
    b1c = b1.reshape(H1, 1).astype(jnp.float32)
    b2c = b2.reshape(H2, 1).astype(jnp.float32)
    w3c = w3.reshape(H2, 1).astype(jnp.float32)
    b3c = b3.reshape(1, 1).astype(jnp.float32)

    in_specs = [
        pl.BlockSpec((tb, D), lambda i: (i, 0)),     # x tile, row-major (no pad/transpose copy)
        pl.BlockSpec((H1, D), lambda i: (0, 0)),     # W1 (resident across grid steps)
        pl.BlockSpec((H1, 1), lambda i: (0, 0)),     # b1
        pl.BlockSpec((H2, H1), lambda i: (0, 0)),    # W2 (resident)
        pl.BlockSpec((H2, 1), lambda i: (0, 0)),     # b2
        pl.BlockSpec((H2, 1), lambda i: (0, 0)),     # w3 as a column
        pl.BlockSpec((1, 1), lambda i: (0, 0)),      # b3
    ]
    # Lane-padded output (num_tiles*tb) so every store is a full-lane unmasked
    # vst; lanes >= B (fed by the partial last input tile's garbage rows) are
    # sliced off below.  Lanes stay independent end-to-end, so garbage tail rows
    # can never contaminate valid outputs.
    out_specs = pl.BlockSpec((1, tb), lambda i: (0, i))

    out_t = pl.pallas_call(
        mlp_kernel,
        out_shape=jax.ShapeDtypeStruct((1, num_tiles * tb), jnp.float32),
        grid=(num_tiles,),
        in_specs=in_specs,
        out_specs=out_specs,
        compiler_params=pltpu.CompilerParams(
            dimension_semantics=("parallel",),
        ),
    )(x, w1b, b1c, w2b, b2c, w3c, b3c)

    return out_t[0, :B].reshape(B, 1)


def init_params(key, input_dim):
    """Deterministic synthetic params, PyTorch nn.Linear layout and init."""
    ks = jax.random.split(key, 6)

    def linear(kw, kb, fan_in, fan_out):
        bound = 1.0 / jnp.sqrt(float(fan_in))
        w = jax.random.uniform(kw, (fan_out, fan_in), jnp.float32, -bound, bound)
        b = jax.random.uniform(kb, (fan_out,), jnp.float32, -bound, bound)
        return w, b

    w1, b1 = linear(ks[0], ks[1], input_dim, H1)
    w2, b2 = linear(ks[2], ks[3], H1, H2)
    w3, b3 = linear(ks[4], ks[5], H2, 1)
    return w1, b1, w2, b2, w3, b3


def mlp_reference_f32(x, w1, b1, w2, b2, w3, b3):
    """The PyTorch-spec forward in full f32."""
    h1 = jnp.maximum(x @ w1.T + b1, 0.0)
    h2 = jnp.maximum(h1 @ w2.T + b2, 0.0)
    return h2 @ w3.T + b3


def mlp_reference_bf16(x, w1, b1, w2, b2, w3, b3):
    """Reference matching the kernel's precision (bf16 MXU operands, f32 accum)."""
    h1 = jnp.dot(x.astype(jnp.bfloat16), w1.astype(jnp.bfloat16).T,
                 preferred_element_type=jnp.float32) + b1
    h1 = jnp.maximum(h1, 0.0)
    h2 = jnp.dot(h1.astype(jnp.bfloat16), w2.astype(jnp.bfloat16).T,
                 preferred_element_type=jnp.float32) + b2
    h2 = jnp.maximum(h2, 0.0)
    return h2 @ w3.T + b3


if __name__ == "__main__":
    key = jax.random.PRNGKey(0)
    k_x, k_p, k_x2 = jax.random.split(key, 3)

    input_dim = 32
    params = init_params(k_p, input_dim)

    # Small synthetic tabular batch (single 128-lane tile, partial input block).
    batch = 16
    x = jax.random.normal(k_x, (batch, input_dim), jnp.float32)
    out = jax.block_until_ready(mlp_forward(x, *params))
    assert out.shape == (batch, 1)
    ref_bf = mlp_reference_bf16(x, *params)
    ref_f32 = mlp_reference_f32(x, *params)
    assert jnp.allclose(out, ref_bf, atol=2e-3, rtol=2e-3)
    assert jnp.allclose(out, ref_f32, atol=1e-1, rtol=1e-1)

    # Batch not divisible by the tile and > 1 grid tile (exercises the partial
    # last input block and the v7x two-tile split path).
    batch2 = 300
    x2 = jax.random.normal(k_x2, (batch2, input_dim), jnp.float32)
    out2 = jax.block_until_ready(mlp_forward(x2, *params))
    assert out2.shape == (batch2, 1)
    ref2_bf = mlp_reference_bf16(x2, *params)
    ref2_f32 = mlp_reference_f32(x2, *params)
    assert jnp.allclose(out2, ref2_bf, atol=2e-3, rtol=2e-3)
    assert jnp.allclose(out2, ref2_f32, atol=1e-1, rtol=1e-1)

    print("KERNEL_OK")
</pallas_src>

<mosaic_0001>
module attributes {stable_mosaic.version = 11 : i64} {
  func.func @mlp_kernel(%arg0: i32, %arg1: memref<128x32xf32, #tpu.memory_space<vmem>>, %arg2: memref<128x32xbf16, #tpu.memory_space<vmem>>, %arg3: memref<128x1xf32, #tpu.memory_space<vmem>>, %arg4: memref<64x128xbf16, #tpu.memory_space<vmem>>, %arg5: memref<64x1xf32, #tpu.memory_space<vmem>>, %arg6: memref<64x1xf32, #tpu.memory_space<vmem>>, %arg7: memref<1x1xf32, #tpu.memory_space<vmem>>, %arg8: memref<1x128xf32, #tpu.memory_space<vmem>>) attributes {dimension_semantics = [#tpu.dimension_semantics<parallel>], iteration_bounds = array<i64: 1>, scalar_prefetch = 0 : i64, scratch_operands = 0 : i64, tpu.core_type = #tpu.core_type<tc>, window_params = [{transform_indices = @transform_0, window_bounds = array<i64: 128, 32>}, {pipeline_mode = #tpu.pipeline_mode<synchronous>, transform_indices = @transform_1, window_bounds = array<i64: 128, 32>}, {pipeline_mode = #tpu.pipeline_mode<synchronous>, transform_indices = @transform_2, window_bounds = array<i64: 128, 1>}, {pipeline_mode = #tpu.pipeline_mode<synchronous>, transform_indices = @transform_3, window_bounds = array<i64: 64, 128>}, {pipeline_mode = #tpu.pipeline_mode<synchronous>, transform_indices = @transform_4, window_bounds = array<i64: 64, 1>}, {pipeline_mode = #tpu.pipeline_mode<synchronous>, transform_indices = @transform_5, window_bounds = array<i64: 64, 1>}, {pipeline_mode = #tpu.pipeline_mode<synchronous>, transform_indices = @transform_6, window_bounds = array<i64: 1, 1>}, {transform_indices = @transform_7, window_bounds = array<i64: 1, 128>}]} {
    %c0 = arith.constant 0 : index
    %c0_0 = arith.constant 0 : index
    %0 = vector.load %arg1[%c0, %c0_0] : memref<128x32xf32, #tpu.memory_space<vmem>>, vector<128x32xf32>
    %1 = arith.truncf %0 : vector<128x32xf32> to vector<128x32xbf16>
    %c0_1 = arith.constant 0 : index
    %c0_2 = arith.constant 0 : index
    %2 = vector.load %arg2[%c0_1, %c0_2] : memref<128x32xbf16, #tpu.memory_space<vmem>>, vector<128x32xbf16>
    %cst = arith.constant dense<0.000000e+00> : vector<128x128xf32>
    %3 = tpu.matmul %2, %1, %cst {dimension_numbers = #tpu.dot_dimension_numbers<[1], [1], [0], [0], [0, 0, 1, 0], [], []>} : vector<128x32xbf16>, vector<128x32xbf16>, vector<128x128xf32> -> vector<128x128xf32>
    %c0_3 = arith.constant 0 : index
    %c0_4 = arith.constant 0 : index
    %4 = vector.load %arg3[%c0_3, %c0_4] : memref<128x1xf32, #tpu.memory_space<vmem>>, vector<128x1xf32>
    %5 = vector.broadcast %4 : vector<128x1xf32> to vector<128x128xf32>
    %6 = arith.addf %3, %5 : vector<128x128xf32>
    %cst_5 = arith.constant 0.000000e+00 : f32
    %7 = vector.broadcast %cst_5 : f32 to vector<128x128xf32>
    %8 = arith.maximumf %6, %7 : vector<128x128xf32>
    %c0_6 = arith.constant 0 : index
    %c0_7 = arith.constant 0 : index
    %9 = vector.load %arg4[%c0_6, %c0_7] : memref<64x128xbf16, #tpu.memory_space<vmem>>, vector<64x128xbf16>
    %10 = arith.truncf %8 : vector<128x128xf32> to vector<128x128xbf16>
    %cst_8 = arith.constant dense<0.000000e+00> : vector<64x128xf32>
    %11 = tpu.matmul %9, %10, %cst_8 {dimension_numbers = #tpu.dot_dimension_numbers<[1], [0], [0], [1], [0, 0, 1, 1], [], []>} : vector<64x128xbf16>, vector<128x128xbf16>, vector<64x128xf32> -> vector<64x128xf32>
    %c0_9 = arith.constant 0 : index
    %c0_10 = arith.constant 0 : index
    %12 = vector.load %arg5[%c0_9, %c0_10] : memref<64x1xf32, #tpu.memory_space<vmem>>, vector<64x1xf32>
    %13 = vector.broadcast %12 : vector<64x1xf32> to vector<64x128xf32>
    %14 = arith.addf %11, %13 : vector<64x128xf32>
    %cst_11 = arith.constant 0.000000e+00 : f32
    %15 = vector.broadcast %cst_11 : f32 to vector<64x128xf32>
    %16 = arith.maximumf %14, %15 : vector<64x128xf32>
    %c0_12 = arith.constant 0 : index
    %c0_13 = arith.constant 0 : index
    %17 = vector.load %arg6[%c0_12, %c0_13] : memref<64x1xf32, #tpu.memory_space<vmem>>, vector<64x1xf32>
    %18 = vector.broadcast %17 : vector<64x1xf32> to vector<64x128xf32>
    %19 = arith.mulf %16, %18 : vector<64x128xf32>
    %cst_14 = arith.constant dense<0.000000e+00> : vector<128xf32>
    %20 = vector.multi_reduction <add>, %19, %cst_14 [0] : vector<64x128xf32> to vector<128xf32>
    %21 = vector.shape_cast %20 : vector<128xf32> to vector<1x128xf32>
    %c0_15 = arith.constant 0 : index
    %c0_16 = arith.constant 0 : index
    %22 = vector.load %arg7[%c0_15, %c0_16] : memref<1x1xf32, #tpu.memory_space<vmem>>, vector<1x1xf32>
    %23 = vector.broadcast %22 : vector<1x1xf32> to vector<1x128xf32>
    %24 = arith.addf %21, %23 : vector<1x128xf32>
    %c0_17 = arith.constant 0 : index
    %c0_18 = arith.constant 0 : index
    %25 = vector.load %arg8[%c0_17, %c0_18] : memref<1x128xf32, #tpu.memory_space<vmem>>, vector<1x128xf32>
    tpu.vector_store %arg8[%c0_17, %c0_18], %24 {strides = array<i32>} : memref<1x128xf32, #tpu.memory_space<vmem>>, vector<1x128xf32>,
    return
  }
  func.func @transform_0(%arg0: i32) -> (i32, i32) {
    %c0_i32 = arith.constant 0 : i32
    %c0_i32_0 = arith.constant 0 : i32
    return %arg0, %c0_i32 : i32, i32
  }
  func.func @transform_1(%arg0: i32) -> (i32, i32) {
    %c0_i32 = arith.constant 0 : i32
    %c0_i32_0 = arith.constant 0 : i32
    %c0_i32_1 = arith.constant 0 : i32
    return %c0_i32, %c0_i32_0 : i32, i32
  }
  func.func @transform_2(%arg0: i32) -> (i32, i32) {
    %c0_i32 = arith.constant 0 : i32
    %c0_i32_0 = arith.constant 0 : i32
    %c0_i32_1 = arith.constant 0 : i32
    return %c0_i32, %c0_i32_0 : i32, i32
  }
  func.func @transform_3(%arg0: i32) -> (i32, i32) {
    %c0_i32 = arith.constant 0 : i32
    %c0_i32_0 = arith.constant 0 : i32
    %c0_i32_1 = arith.constant 0 : i32
    return %c0_i32, %c0_i32_0 : i32, i32
  }
  func.func @transform_4(%arg0: i32) -> (i32, i32) {
    %c0_i32 = arith.constant 0 : i32
    %c0_i32_0 = arith.constant 0 : i32
    %c0_i32_1 = arith.constant 0 : i32
    return %c0_i32, %c0_i32_0 : i32, i32
  }
  func.func @transform_5(%arg0: i32) -> (i32, i32) {
    %c0_i32 = arith.constant 0 : i32
    %c0_i32_0 = arith.constant 0 : i32
    %c0_i32_1 = arith.constant 0 : i32
    return %c0_i32, %c0_i32_0 : i32, i32
  }
  func.func @transform_6(%arg0: i32) -> (i32, i32) {
    %c0_i32 = arith.constant 0 : i32
    %c0_i32_0 = arith.constant 0 : i32
    %c0_i32_1 = arith.constant 0 : i32
    return %c0_i32, %c0_i32_0 : i32, i32
  }
  func.func @transform_7(%arg0: i32) -> (i32, i32) {
    %c0_i32 = arith.constant 0 : i32
    %c0_i32_0 = arith.constant 0 : i32
    return %c0_i32, %arg0 : i32, i32
  }
}

</mosaic_0001>

<llo_original>
// kernel: tpu_custom_call.1
$region0: #{tpu_custom_call.1}
  #allocation0 [shape = 'u32[]', space=smem, size = 0x4, offset = 0x4, fixed_abs, tag = 'smem constant byte address 0x4 - core index']
  #allocation1 [shape = 'u32[72,128]{1,0:T(1,128)}', space=vmem, size = 0x9000, scoped, tag = 'internal scratch']
  #allocation2 [shape = 'f32[1,1]{1,0:T(1,128)S(1)}', space=vmem, size = 0x200, scoped, tag = 'scoped memory for tpu_custom_call.1']
  %s0 = inlined_call_operand.vmem [shape: f32[16,32], index: 0, kind: input, shape index: {}]
  %s1 = inlined_call_operand.vmem [shape: bf16[128,32], index: 1, kind: input, shape index: {}]
  %s2 = inlined_call_operand.vmem [shape: f32[128,1], index: 2, kind: input, shape index: {}]
  %s3 = inlined_call_operand.vmem [shape: bf16[64,128], index: 3, kind: input, shape index: {}]
  %s4 = inlined_call_operand.vmem [shape: f32[64,1], index: 4, kind: input, shape index: {}]
  %s5 = inlined_call_operand.vmem [shape: f32[64,1], index: 5, kind: input, shape index: {}]
  %s6 = inlined_call_operand.<no memory space> [shape: f32[1,1], index: 6, kind: input, shape index: {}]
  %s7 = inlined_call_operand.hbm [shape: f32[1,128], index: 7, kind: output, shape index: {}]
  %s8 = sld [smem:[#allocation0]]
  $region38: #{tpu_custom_call.1} parent=0
    _
  %s10 = ssub.s32 1, %s8
  %s11 = scalar_select 0, %s10, %s8
  %v12 = vstv %s6
  %13 = vst [vmem:[#allocation2] sm:$0x1] %v12
  $region1: #{tpu_custom_call.1} parent=0
    #allocation3 [shape = 'u8[512]{0}', space=vmem, size = 0x400, scoped, tag = 'output window, operand 0, single buffered']
    #allocation4 [shape = 's32[1]{0}', space=sflag, size = 0x4, scoped, tag = 'scoped memory for tpu_custom_call.1']
    %14 = vsyncpa [#allocation4], 0
    // Predicated region
    $region2: #{tpu_custom_call.1} parent=1 // pred_check
      _
    $region3: #{tpu_custom_call.1} parent=1 // pred_check_branch
      %16 = sbr.rel (0) target = $region5
    $region4: #{tpu_custom_call.1} parent=1 // pred_region
      _
    $region5: #{tpu_custom_call.1} parent=1 // pred_fallthru
      _
    // Predicated region
    $region6: #{tpu_custom_call.1} parent=1 // pred_check
      _
    $region7: #{tpu_custom_call.1} parent=1 // pred_check_branch
      %18 = sbr.rel (0) target = $region9
    $region8: #{tpu_custom_call.1} parent=1 // pred_region
      _
    $region9: #{tpu_custom_call.1} parent=1 // pred_fallthru
      _
    // Predicated region
    $region10: #{tpu_custom_call.1} parent=1 // pred_check
      _
    $region11: #{tpu_custom_call.1} parent=1 // pred_check_branch
      %20 = sbr.rel (0) target = $region13
    $region12: #{tpu_custom_call.1} parent=1 // pred_region
      _
    $region13: #{tpu_custom_call.1} parent=1 // pred_fallthru
      _
    // Predicated region
    $region14: #{tpu_custom_call.1} parent=1 // pred_check
      _
    $region15: #{tpu_custom_call.1} parent=1 // pred_check_branch
      %22 = sbr.rel (0) target = $region17
    $region16: #{tpu_custom_call.1} parent=1 // pred_region
      _
    $region17: #{tpu_custom_call.1} parent=1 // pred_fallthru
      _
    // Predicated region
    $region18: #{tpu_custom_call.1} parent=1 // pred_check
      _
    $region19: #{tpu_custom_call.1} parent=1 // pred_check_branch
      %24 = sbr.rel (0) target = $region21
    $region20: #{tpu_custom_call.1} parent=1 // pred_region
      _
    $region21: #{tpu_custom_call.1} parent=1 // pred_fallthru
      _
    // Predicated region
    $region22: #{tpu_custom_call.1} parent=1 // pred_check
      _
    $region23: #{tpu_custom_call.1} parent=1 // pred_check_branch
      %26 = sbr.rel (0) target = $region25
    $region24: #{tpu_custom_call.1} parent=1 // pred_region
      _
    $region25: #{tpu_custom_call.1} parent=1 // pred_fallthru
      _
    // Predicated region
    $region26: #{tpu_custom_call.1} parent=1 // pred_check
      _
    $region27: #{tpu_custom_call.1} parent=1 // pred_check_branch
      %28 = sbr.rel (0) target = $region29
    $region28: #{tpu_custom_call.1} parent=1 // pred_region
      _
    $region29: #{tpu_custom_call.1} parent=1 // pred_fallthru
      _
    %v29 = vld [vmem:[%s0] sm:$0xff]
    %v30 = vld [vmem:[%s0 + $0x8] sm:$0xff]
    %v31 = vld [vmem:[%s0 + $0x10] sm:$0xff]
    %v32 = vld [vmem:[%s0 + $0x18] sm:$0xff]
    %v33 = vld [vmem:[%s0 + $0x20] sm:$0xff]
    %v34 = vld [vmem:[%s0 + $0x28] sm:$0xff]
    %v35 = vld [vmem:[%s0 + $0x30] sm:$0xff]
    %v36 = vld [vmem:[%s0 + $0x38] sm:$0xff]
    %v37 = vld [vmem:[%s0 + $0x40] sm:$0xff]
    %v38 = vld [vmem:[%s0 + $0x48] sm:$0xff]
    %v39 = vld [vmem:[%s0 + $0x50] sm:$0xff]
    %v40 = vld [vmem:[%s0 + $0x58] sm:$0xff]
    %v41 = vld [vmem:[%s0 + $0x60] sm:$0xff]
    %v42 = vld [vmem:[%s0 + $0x68] sm:$0xff]
    %v43 = vld [vmem:[%s0 + $0x70] sm:$0xff]
    %v44 = vld [vmem:[%s0 + $0x78] sm:$0xff]
    %v45 = vpack.c.bf16 %v30, %v29
    %v46 = vpack.c.bf16 %v32, %v31
    %v47 = vpack.c.bf16 %v34, %v33
    %v48 = vpack.c.bf16 %v36, %v35
    %v49 = vpack.c.bf16 %v38, %v37
    %v50 = vpack.c.bf16 %v40, %v39
    %v51 = vpack.c.bf16 %v42, %v41
    %v52 = vpack.c.bf16 %v44, %v43
    %v53 = vld [vmem:[%s1] sm:$0xf]
    %v54 = vld [vmem:[%s1 + $0x4] sm:$0xf]
    %v55 = vld [vmem:[%s1 + $0x8] sm:$0xf]
    %v56 = vld [vmem:[%s1 + $0xc] sm:$0xf]
    %v57 = vld [vmem:[%s1 + $0x10] sm:$0xf]
    %v58 = vld [vmem:[%s1 + $0x14] sm:$0xf]
    %v59 = vld [vmem:[%s1 + $0x18] sm:$0xf]
    %v60 = vld [vmem:[%s1 + $0x1c] sm:$0xf]
    %v61 = vld [vmem:[%s1 + $0x20] sm:$0xf]
    %v62 = vld [vmem:[%s1 + $0x24] sm:$0xf]
    %v63 = vld [vmem:[%s1 + $0x28] sm:$0xf]
    %v64 = vld [vmem:[%s1 + $0x2c] sm:$0xf]
    %v65 = vld [vmem:[%s1 + $0x30] sm:$0xf]
    %v66 = vld [vmem:[%s1 + $0x34] sm:$0xf]
    %v67 = vld [vmem:[%s1 + $0x38] sm:$0xf]
    %v68 = vld [vmem:[%s1 + $0x3c] sm:$0xf]
    %v69 = vld [vmem:[%s2] sm:$0xff]
    %v70 = vld [vmem:[%s2 + $0x8] sm:$0xff]
    %v71 = vld [vmem:[%s2 + $0x10] sm:$0xff]
    %v72 = vld [vmem:[%s2 + $0x18] sm:$0xff]
    %v73 = vld [vmem:[%s2 + $0x20] sm:$0xff]
    %v74 = vld [vmem:[%s2 + $0x28] sm:$0xff]
    %v75 = vld [vmem:[%s2 + $0x30] sm:$0xff]
    %v76 = vld [vmem:[%s2 + $0x38] sm:$0xff]
    %v77 = vld [vmem:[%s2 + $0x40] sm:$0xff]
    %v78 = vld [vmem:[%s2 + $0x48] sm:$0xff]
    %v79 = vld [vmem:[%s2 + $0x50] sm:$0xff]
    %v80 = vld [vmem:[%s2 + $0x58] sm:$0xff]
    %v81 = vld [vmem:[%s2 + $0x60] sm:$0xff]
    %v82 = vld [vmem:[%s2 + $0x68] sm:$0xff]
    %v83 = vld [vmem:[%s2 + $0x70] sm:$0xff]
    %v84 = vld [vmem:[%s2 + $0x78] sm:$0xff]
    %86 = vset.pattern.permute.xlu0 0
    %87 = vperm.xlu0 %86, %v69
    %v88 = vpop.permute.xlu0 %87
    %91 = vset.pattern.permute.xlu0 0
    %92 = vperm.xlu0 %91, %v70
    %v93 = vpop.permute.xlu0 %92
    %96 = vset.pattern.permute.xlu0 0
    %97 = vperm.xlu0 %96, %v71
    %v98 = vpop.permute.xlu0 %97
    %101 = vset.pattern.permute.xlu0 0
    %102 = vperm.xlu0 %101, %v72
    %v103 = vpop.permute.xlu0 %102
    %106 = vset.pattern.permute.xlu0 0
    %107 = vperm.xlu0 %106, %v73
    %v108 = vpop.permute.xlu0 %107
    %111 = vset.pattern.permute.xlu0 0
    %112 = vperm.xlu0 %111, %v74
    %v113 = vpop.permute.xlu0 %112
    %116 = vset.pattern.permute.xlu0 0
    %117 = vperm.xlu0 %116, %v75
    %v118 = vpop.permute.xlu0 %117
    %121 = vset.pattern.permute.xlu0 0
    %122 = vperm.xlu0 %121, %v76
    %v123 = vpop.permute.xlu0 %122
    %126 = vset.pattern.permute.xlu0 0
    %127 = vperm.xlu0 %126, %v77
    %v128 = vpop.permute.xlu0 %127
    %131 = vset.pattern.permute.xlu0 0
    %132 = vperm.xlu0 %131, %v78
    %v133 = vpop.permute.xlu0 %132
    %136 = vset.pattern.permute.xlu0 0
    %137 = vperm.xlu0 %136, %v79
    %v138 = vpop.permute.xlu0 %137
    %141 = vset.pattern.permute.xlu0 0
    %142 = vperm.xlu0 %141, %v80
    %v143 = vpop.permute.xlu0 %142
    %146 = vset.pattern.permute.xlu0 0
    %147 = vperm.xlu0 %146, %v81
    %v148 = vpop.permute.xlu0 %147
    %151 = vset.pattern.permute.xlu0 0
    %152 = vperm.xlu0 %151, %v82
    %v153 = vpop.permute.xlu0 %152
    %156 = vset.pattern.permute.xlu0 0
    %157 = vperm.xlu0 %156, %v83
    %v158 = vpop.permute.xlu0 %157
    %161 = vset.pattern.permute.xlu0 0
    %162 = vperm.xlu0 %161, %v84
    %v163 = vpop.permute.xlu0 %162
    %v181 = vunpack.c.l.b16 %v53
    %v182 = vunpack.c.l.b16 %v54
    %v183 = vunpack.c.l.b16 %v55
    %v184 = vunpack.c.l.b16 %v56
    %v185 = vunpack.c.l.b16 %v57
    %v186 = vunpack.c.l.b16 %v58
    %v187 = vunpack.c.l.b16 %v59
    %v188 = vunpack.c.l.b16 %v60
    %v189 = vunpack.c.l.b16 %v61
    %v190 = vunpack.c.l.b16 %v62
    %v191 = vunpack.c.l.b16 %v63
    %v192 = vunpack.c.l.b16 %v64
    %v193 = vunpack.c.l.b16 %v65
    %v194 = vunpack.c.l.b16 %v66
    %v195 = vunpack.c.l.b16 %v67
    %v196 = vunpack.c.l.b16 %v68
    %v197 = vpack.c.b16 %v182, %v181
    %v198 = vpack.c.b16 %v184, %v183
    %v199 = vpack.c.b16 %v186, %v185
    %v200 = vpack.c.b16 %v188, %v187
    %v201 = vpack.c.b16 %v190, %v189
    %v202 = vpack.c.b16 %v192, %v191
    %v203 = vpack.c.b16 %v194, %v193
    %v204 = vpack.c.b16 %v196, %v195
    %vm205 = vcmask 261120
    %v207 = vsel %vm205, %v197, 0
    %v210 = vsel %vm205, %v198, 0
    %v213 = vsel %vm205, %v199, 0
    %v216 = vsel %vm205, %v200, 0
    %v219 = vsel %vm205, %v201, 0
    %v222 = vsel %vm205, %v202, 0
    %v225 = vsel %vm205, %v203, 0
    %v228 = vsel %vm205, %v204, 0
    %v231 = vsel %vm205, %v45, 0
    %v234 = vsel %vm205, %v46, 0
    %v237 = vsel %vm205, %v47, 0
    %v240 = vsel %vm205, %v48, 0
    %v243 = vsel %vm205, %v49, 0
    %v246 = vsel %vm205, %v50, 0
    %v249 = vsel %vm205, %v51, 0
    %v252 = vsel %vm205, %v52, 0
    %254 = vmatpush.bf16.xpose.msra.mxu0 %v252
    %255 = vmatpush.bf16.xpose.msra.mxu0 %v249
    %256 = vmatpush.bf16.xpose.msra.mxu0 %v246
    %257 = vmatpush.bf16.xpose.msra.mxu0 %v243
    %258 = vmatpush.bf16.xpose.msra.mxu0 %v240
    %259 = vmatpush.bf16.xpose.msra.mxu0 %v237
    %260 = vmatpush.bf16.xpose.msra.mxu0 %v234
    %261 = vmatpush.bf16.xpose.msra.mxu0 %v231
    %262 = vmatmul.bf16.gmra.mxu0 %v207
    %v263 = vpop.f32.mrf.mxu0
    %v264 = vadd.f32 %v88, %v263
    %v265 = vpop.f32.mrf.mxu0
    %v266 = vadd.f32 %v93, %v265
    %267 = vmatmul.bf16.gmra.mxu0 %v210
    %v268 = vpop.f32.mrf.mxu0
    %v269 = vadd.f32 %v98, %v268
    %v270 = vpop.f32.mrf.mxu0
    %v271 = vadd.f32 %v103, %v270
    %272 = vmatmul.bf16.gmra.mxu0 %v213
    %v273 = vpop.f32.mrf.mxu0
    %v274 = vadd.f32 %v108, %v273
    %v275 = vpop.f32.mrf.mxu0
    %v276 = vadd.f32 %v113, %v275
    %277 = vmatmul.bf16.gmra.mxu0 %v216
    %v278 = vpop.f32.mrf.mxu0
    %v279 = vadd.f32 %v118, %v278
    %v280 = vpop.f32.mrf.mxu0
    %v281 = vadd.f32 %v123, %v280
    %282 = vmatmul.bf16.gmra.mxu0 %v219
    %v283 = vpop.f32.mrf.mxu0
    %v284 = vadd.f32 %v128, %v283
    %v285 = vpop.f32.mrf.mxu0
    %v286 = vadd.f32 %v133, %v285
    %287 = vmatmul.bf16.gmra.mxu0 %v222
    %v288 = vpop.f32.mrf.mxu0
    %v289 = vadd.f32 %v138, %v288
    %v290 = vpop.f32.mrf.mxu0
    %v291 = vadd.f32 %v143, %v290
    %292 = vmatmul.bf16.gmra.mxu0 %v225
    %v293 = vpop.f32.mrf.mxu0
    %v294 = vadd.f32 %v148, %v293
    %v295 = vpop.f32.mrf.mxu0
    %v296 = vadd.f32 %v153, %v295
    %297 = vmatmul.bf16.gmra.mxu0 %v228
    %v298 = vpop.f32.mrf.mxu0
    %v299 = vadd.f32 %v158, %v298
    %v300 = vpop.f32.mrf.mxu0
    %v301 = vadd.f32 %v163, %v300
    %302 = vdwg.mxu0
    %v303 = vmax.f32 %v264, 0.0
    %v304 = vmax.f32 %v266, 0.0
    %v305 = vmax.f32 %v269, 0.0
    %v306 = vmax.f32 %v271, 0.0
    %v307 = vmax.f32 %v274, 0.0
    %v308 = vmax.f32 %v276, 0.0
    %v309 = vmax.f32 %v279, 0.0
    %v310 = vmax.f32 %v281, 0.0
    %v311 = vmax.f32 %v284, 0.0
    %v312 = vmax.f32 %v286, 0.0
    %v313 = vmax.f32 %v289, 0.0
    %v314 = vmax.f32 %v291, 0.0
    %v315 = vmax.f32 %v294, 0.0
    %v316 = vmax.f32 %v296, 0.0
    %v317 = vmax.f32 %v299, 0.0
    %v318 = vmax.f32 %v301, 0.0
    %v319 = vld [vmem:[%s3] sm:$0xf]
    %v320 = vld [vmem:[%s3 + $0x4] sm:$0xf]
    %v321 = vld [vmem:[%s3 + $0x8] sm:$0xf]
    %v322 = vld [vmem:[%s3 + $0xc] sm:$0xf]
    %v323 = vld [vmem:[%s3 + $0x10] sm:$0xf]
    %v324 = vld [vmem:[%s3 + $0x14] sm:$0xf]
    %v325 = vld [vmem:[%s3 + $0x18] sm:$0xf]
    %v326 = vld [vmem:[%s3 + $0x1c] sm:$0xf]
    %v327 = vpack.c.bf16 %v304, %v303
    %v328 = vpack.c.bf16 %v306, %v305
    %v329 = vpack.c.bf16 %v308, %v307
    %v330 = vpack.c.bf16 %v310, %v309
    %v331 = vpack.c.bf16 %v312, %v311
    %v332 = vpack.c.bf16 %v314, %v313
    %v333 = vpack.c.bf16 %v316, %v315
    %v334 = vpack.c.bf16 %v318, %v317
    %v335 = vld [vmem:[%s4] sm:$0xff]
    %v336 = vld [vmem:[%s4 + $0x8] sm:$0xff]
    %v337 = vld [vmem:[%s4 + $0x10] sm:$0xff]
    %v338 = vld [vmem:[%s4 + $0x18] sm:$0xff]
    %v339 = vld [vmem:[%s4 + $0x20] sm:$0xff]
    %v340 = vld [vmem:[%s4 + $0x28] sm:$0xff]
    %v341 = vld [vmem:[%s4 + $0x30] sm:$0xff]
    %v342 = vld [vmem:[%s4 + $0x38] sm:$0xff]
    %344 = vset.pattern.permute.xlu0 0
    %345 = vperm.xlu0 %344, %v335
    %v346 = vpop.permute.xlu0 %345
    %349 = vset.pattern.permute.xlu0 0
    %350 = vperm.xlu0 %349, %v336
    %v351 = vpop.permute.xlu0 %350
    %354 = vset.pattern.permute.xlu0 0
    %355 = vperm.xlu0 %354, %v337
    %v356 = vpop.permute.xlu0 %355
    %359 = vset.pattern.permute.xlu0 0
    %360 = vperm.xlu0 %359, %v338
    %v361 = vpop.permute.xlu0 %360
    %364 = vset.pattern.permute.xlu0 0
    %365 = vperm.xlu0 %364, %v339
    %v366 = vpop.permute.xlu0 %365
    %369 = vset.pattern.permute.xlu0 0
    %370 = vperm.xlu0 %369, %v340
    %v371 = vpop.permute.xlu0 %370
    %374 = vset.pattern.permute.xlu0 0
    %375 = vperm.xlu0 %374, %v341
    %v376 = vpop.permute.xlu0 %375
    %379 = vset.pattern.permute.xlu0 0
    %380 = vperm.xlu0 %379, %v342
    %v381 = vpop.permute.xlu0 %380
    %v391 = vunpack.c.l.b16 %v319
    %v392 = vunpack.c.l.b16 %v320
    %v393 = vunpack.c.l.b16 %v321
    %v394 = vunpack.c.l.b16 %v322
    %v395 = vunpack.c.l.b16 %v323
    %v396 = vunpack.c.l.b16 %v324
    %v397 = vunpack.c.l.b16 %v325
    %v398 = vunpack.c.l.b16 %v326
    %v399 = vpack.c.b16 %v392, %v391
    %v400 = vpack.c.b16 %v394, %v393
    %v401 = vpack.c.b16 %v396, %v395
    %v402 = vpack.c.b16 %v398, %v397
    %407 = vmatpush.bf16.msra.mxu0 %v334
    %408 = vmatpush.bf16.msra.mxu0 %v333
    %409 = vmatpush.bf16.msra.mxu0 %v332
    %410 = vmatpush.bf16.msra.mxu0 %v331
    %411 = vmatpush.bf16.msra.mxu0 %v330
    %412 = vmatpush.bf16.msra.mxu0 %v329
    %413 = vmatpush.bf16.msra.mxu0 %v328
    %414 = vmatpush.bf16.msra.mxu0 %v327
    %415 = vmatmul.bf16.gmra.mxu0 %v399
    %v416 = vpop.f32.mrf.mxu0
    %v417 = vadd.f32 %v346, %v416
    %v418 = vpop.f32.mrf.mxu0
    %v419 = vadd.f32 %v351, %v418
    %420 = vmatmul.bf16.gmra.mxu0 %v400
    %v421 = vpop.f32.mrf.mxu0
    %v422 = vadd.f32 %v356, %v421
    %v423 = vpop.f32.mrf.mxu0
    %v424 = vadd.f32 %v361, %v423
    %425 = vmatmul.bf16.gmra.mxu0 %v401
    %v426 = vpop.f32.mrf.mxu0
    %v427 = vadd.f32 %v366, %v426
    %v428 = vpop.f32.mrf.mxu0
    %v429 = vadd.f32 %v371, %v428
    %430 = vmatmul.bf16.gmra.mxu0 %v402
    %v431 = vpop.f32.mrf.mxu0
    %v432 = vadd.f32 %v376, %v431
    %v433 = vpop.f32.mrf.mxu0
    %v434 = vadd.f32 %v381, %v433
    %435 = vdwg.mxu0
    %v436 = vmax.f32 %v417, 0.0
    %v437 = vmax.f32 %v419, 0.0
    %v438 = vmax.f32 %v422, 0.0
    %v439 = vmax.f32 %v424, 0.0
    %v440 = vmax.f32 %v427, 0.0
    %v441 = vmax.f32 %v429, 0.0
    %v442 = vmax.f32 %v432, 0.0
    %v443 = vmax.f32 %v434, 0.0
    %v444 = vld [vmem:[%s5] sm:$0xff]
    %v445 = vld [vmem:[%s5 + $0x8] sm:$0xff]
    %v446 = vld [vmem:[%s5 + $0x10] sm:$0xff]
    %v447 = vld [vmem:[%s5 + $0x18] sm:$0xff]
    %v448 = vld [vmem:[%s5 + $0x20] sm:$0xff]
    %v449 = vld [vmem:[%s5 + $0x28] sm:$0xff]
    %v450 = vld [vmem:[%s5 + $0x30] sm:$0xff]
    %v451 = vld [vmem:[%s5 + $0x38] sm:$0xff]
    %453 = vset.pattern.permute.xlu0 0
    %454 = vperm.xlu0 %453, %v444
    %v455 = vpop.permute.xlu0 %454
    %458 = vset.pattern.permute.xlu0 0
    %459 = vperm.xlu0 %458, %v445
    %v460 = vpop.permute.xlu0 %459
    %463 = vset.pattern.permute.xlu0 0
    %464 = vperm.xlu0 %463, %v446
    %v465 = vpop.permute.xlu0 %464
    %468 = vset.pattern.permute.xlu0 0
    %469 = vperm.xlu0 %468, %v447
    %v470 = vpop.permute.xlu0 %469
    %473 = vset.pattern.permute.xlu0 0
    %474 = vperm.xlu0 %473, %v448
    %v475 = vpop.permute.xlu0 %474
    %478 = vset.pattern.permute.xlu0 0
    %479 = vperm.xlu0 %478, %v449
    %v480 = vpop.permute.xlu0 %479
    %483 = vset.pattern.permute.xlu0 0
    %484 = vperm.xlu0 %483, %v450
    %v485 = vpop.permute.xlu0 %484
    %488 = vset.pattern.permute.xlu0 0
    %489 = vperm.xlu0 %488, %v451
    %v490 = vpop.permute.xlu0 %489
    %v492 = vmul.f32 %v436, %v455
    %v493 = vmul.f32 %v437, %v460
    %v494 = vmul.f32 %v438, %v465
    %v495 = vmul.f32 %v439, %v470
    %v496 = vmul.f32 %v440, %v475
    %v497 = vmul.f32 %v441, %v480
    %v498 = vmul.f32 %v442, %v485
    %v499 = vmul.f32 %v443, %v490
    %v500 = vadd.f32 %v492, %v493
    %v501 = vadd.f32 %v500, %v494
    %v502 = vadd.f32 %v501, %v495
    %v503 = vadd.f32 %v502, %v496
    %v504 = vadd.f32 %v503, %v497
    %v505 = vadd.f32 %v504, %v498
    %v506 = vadd.f32 %v505, %v499
    %v507 = vrot.slane %v506, 4
    %v508 = vadd.f32 %v506, %v507
    %v509 = vrot.slane %v508, 2
    %v510 = vadd.f32 %v508, %v509
    %v511 = vrot.slane %v510, 1
    %v512 = vadd.f32 %v510, %v511
    %v513 = vld [vmem:[#allocation2] sm:$0x1]
    %515 = vset.pattern.permute.xlu0 0
    %516 = vperm.xlu0 %515, %v513
    %v517 = vpop.permute.xlu0 %516
    %v519 = vperm.slane %v517, 0
    %v520 = vadd.f32 %v512, %v519
    %521 = vst [vmem:[#allocation3] sm:$0x1] %v520
    // Predicated region
    $region30: #{tpu_custom_call.1} parent=1 // pred_check
      _
    $region31: #{tpu_custom_call.1} parent=1 // pred_check_branch
      %523 = sbr.rel (0) target = $region33
    $region32: #{tpu_custom_call.1} parent=1 // pred_region
      %525 = vsyncadd [#allocation4], 0
      %s527 = sshll.u32 [#allocation3], 4
      %s528 = int_to_ptr.vmem [resolvable:$true] %s527
      %s529 = sshll.u32 %s7, 4
      %s530 = int_to_ptr.hbm [resolvable:$true] %s529
      %532 = dma.vmem_to_hbm [thread:$0]  %s528, 16, %s530, [#allocation4]
    $region33: #{tpu_custom_call.1} parent=1 // pred_fallthru
      _
    // Predicated region
    $region34: #{tpu_custom_call.1} parent=1 // pred_check
      _
    $region35: #{tpu_custom_call.1} parent=1 // pred_check_branch
      %534 = sbr.rel (0) target = $region37
    $region36: #{tpu_custom_call.1} parent=1 // pred_region
      %536 = dma.done [#allocation4], 16
    $region37: #{tpu_custom_call.1} parent=1 // pred_fallthru
      _
    %537 = vsyncpa [#allocation4], 1

</llo_original>
